<compile_context>
chip_gen: v5e
topology: v5e:2x2
jax: 0.10.0
libtpu: 0.0.40
codegen_flags: <defaults>
</compile_context>

<pallas_src>
import functools

import jax
import jax.numpy as jnp
from jax import lax
from jax.experimental import pallas as pl
from jax.experimental.pallas import tpu as pltpu


def _vmem_limit_bytes():
    """Per-generation scoped-VMEM limit (~3/4 of physical VMEM, clamped)."""
    try:
        cap = int(pltpu.get_tpu_info().vmem_capacity_bytes)
    except Exception:
        cap = 128 * 1024 * 1024
    return max(32 * 1024 * 1024, min(cap * 3 // 4, 100 * 1024 * 1024))


# ----------------------------------------------------------------------------
# Kernel 1: fused self-attention
#   single QKV proj + per-head softmax.V + single out-proj + residual add
#   grid = (B,), one batch element per step.
# ----------------------------------------------------------------------------
def attention_kernel(x_ref, wqkv_ref, bqkv_ref, wo_ref, bo_ref, o_ref, *,
                     num_heads):
    x = x_ref[0]                                   # (T, C) f32
    T, C = x.shape
    Dh = C // num_heads

    # Single lane-dense QKV projection (N = 3C), bf16 MXU / f32 accumulation.
    # The 1/sqrt(Dh) scale is already folded into the Q columns of wqkv/bqkv.
    qkv = jnp.dot(x.astype(jnp.bfloat16), wqkv_ref[...],
                  preferred_element_type=jnp.float32) + bqkv_ref[...]
    qb = qkv[:, 0 * C:1 * C].astype(jnp.bfloat16)
    kb = qkv[:, 1 * C:2 * C].astype(jnp.bfloat16)
    vb = qkv[:, 2 * C:3 * C].astype(jnp.bfloat16)

    # Per-head softmax attention (static unrolled head loop, static slices;
    # softmax statistics kept in f32).
    ctx = []
    for h in range(num_heads):
        sl = slice(h * Dh, (h + 1) * Dh)
        qh, kh, vh = qb[:, sl], kb[:, sl], vb[:, sl]          # (T, Dh) bf16
        # Q.K^T contracting the last dims of both operands (no k.T copy).
        s = lax.dot_general(qh, kh, (((1,), (1,)), ((), ())),
                            preferred_element_type=jnp.float32)   # (T, T) f32
        s = s - jnp.max(s, axis=-1, keepdims=True)
        p = jnp.exp(s)
        inv = pl.reciprocal(jnp.sum(p, axis=-1, keepdims=True), approx=True)
        oh = jnp.dot((p * inv).astype(jnp.bfloat16), vh,
                     preferred_element_type=jnp.float32)          # (T, Dh)
        ctx.append(oh.astype(jnp.bfloat16))

    # Single full-depth output projection (K = C instead of Dh) + residual #1.
    ctx = jnp.concatenate(ctx, axis=-1)                           # (T, C) bf16
    attn = jnp.dot(ctx, wo_ref[...],
                   preferred_element_type=jnp.float32) + bo_ref[...]
    o_ref[0] = (x + attn).astype(o_ref.dtype)                     # y = x + attn


# ----------------------------------------------------------------------------
# Kernel 2: LN1 + FFN (relu) + residual + LN2
#   grid = (B, T // tT), both axes parallel.  Input is y = x + attn from k1.
# ----------------------------------------------------------------------------
def ffn_ln_kernel(y_ref, g1_ref, be1_ref, w1_ref, b1_ref, w2_ref, b2_ref,
                  g2_ref, be2_ref, o_ref, *, eps):
    y = y_ref[0]                                   # (tT, C) f32

    # self_attn_layer_norm (f32 statistics)
    mu = jnp.mean(y, axis=-1, keepdims=True)
    var = jnp.mean((y - mu) ** 2, axis=-1, keepdims=True)
    yn = (y - mu) * lax.rsqrt(var + eps) * g1_ref[...] + be1_ref[...]

    # FFN: relu(fc1) -> fc2 ; bf16 MXU operands, f32 accumulation.
    h = jnp.dot(yn.astype(jnp.bfloat16), w1_ref[...],
                preferred_element_type=jnp.float32) + b1_ref[...]
    h = jnp.maximum(h, 0.0).astype(jnp.bfloat16)   # cast early: halves residency
    z = jnp.dot(h, w2_ref[...],
                preferred_element_type=jnp.float32) + b2_ref[...]
    z = yn + z                                     # residual #2

    # final_layer_norm
    mu2 = jnp.mean(z, axis=-1, keepdims=True)
    var2 = jnp.mean((z - mu2) ** 2, axis=-1, keepdims=True)
    o_ref[0] = ((z - mu2) * lax.rsqrt(var2 + eps) * g2_ref[...]
                + be2_ref[...]).astype(o_ref.dtype)


def _pick_t_tile(T):
    for t in (512, 256, 128):
        if T % t == 0:
            return t
    return T


# ----------------------------------------------------------------------------
# Wrapper: weight fusion / constant folds at trace time, pallas_call plumbing
# ----------------------------------------------------------------------------
def transformer_sentence_encoder_layer(x_tbc, params):
    """x_tbc: (T, B, C) float32.  Returns (out_tbc, attn=None)."""
    T, B, C = x_tbc.shape
    H = params["num_heads"]
    Dh = C // H
    F = params["w1"].shape[1]
    scale = Dh ** -0.5
    eps = 1e-5
    vmem_limit = _vmem_limit_bytes()

    x = jnp.transpose(x_tbc, (1, 0, 2))            # (B, T, C)

    bf = jnp.bfloat16
    # Fold the query scale into wq/bq (constant transform) and fuse Q/K/V into
    # one (C, 3C) weight + (1, 3C) bias.  Biases stay f32 (added post-matmul).
    wqkv = jnp.concatenate(
        [params["wq"] * scale, params["wk"], params["wv"]], axis=1).astype(bf)
    bqkv = jnp.concatenate(
        [params["bq"] * scale, params["bk"], params["bv"]]).reshape(1, 3 * C)
    wo = params["wo"].astype(bf)
    w1 = params["w1"].astype(bf)
    w2 = params["w2"].astype(bf)

    row_full = pl.BlockSpec((1, T, C), lambda b: (b, 0, 0))

    # Kernel 1: fused MHA; writes the lane-dense intermediate y = x + attn,
    # so kernel 2 does not have to re-read x from HBM.
    y = pl.pallas_call(
        functools.partial(attention_kernel, num_heads=H),
        out_shape=jax.ShapeDtypeStruct((B, T, C), jnp.float32),
        grid=(B,),
        in_specs=[
            row_full,                                        # x
            pl.BlockSpec((C, 3 * C), lambda b: (0, 0)),      # wqkv
            pl.BlockSpec((1, 3 * C), lambda b: (0, 0)),      # bqkv
            pl.BlockSpec((C, C), lambda b: (0, 0)),          # wo
            pl.BlockSpec((1, C), lambda b: (0, 0)),          # bo
        ],
        out_specs=row_full,
        compiler_params=pltpu.CompilerParams(
            dimension_semantics=("parallel",),
            vmem_limit_bytes=vmem_limit),
    )(x, wqkv, bqkv, wo, params["bo"].reshape(1, C))

    # Kernel 2: LN1 + FFN + residual + LN2, tiled over T.
    tT = _pick_t_tile(T)
    nT = T // tT
    row_tile = pl.BlockSpec((1, tT, C), lambda b, t: (b, t, 0))
    const = lambda shp: pl.BlockSpec(shp, lambda b, t: (0,) * len(shp))

    out = pl.pallas_call(
        functools.partial(ffn_ln_kernel, eps=eps),
        out_shape=jax.ShapeDtypeStruct((B, T, C), jnp.float32),
        grid=(B, nT),
        in_specs=[
            row_tile,                             # y = x + attn
            const((1, C)), const((1, C)),         # ln1 gamma, beta
            const((C, F)), const((1, F)),         # w1, b1
            const((F, C)), const((1, C)),         # w2, b2
            const((1, C)), const((1, C)),         # ln2 gamma, beta
        ],
        out_specs=row_tile,
        compiler_params=pltpu.CompilerParams(
            dimension_semantics=("parallel", "parallel"),
            vmem_limit_bytes=vmem_limit),
    )(y,
      params["g1"].reshape(1, C), params["be1"].reshape(1, C),
      w1, params["b1"].reshape(1, F),
      w2, params["b2"].reshape(1, C),
      params["g2"].reshape(1, C), params["be2"].reshape(1, C))

    out_tbc = jnp.transpose(out, (1, 0, 2))       # back to (T, B, C)
    return out_tbc, None                          # need_weights=False -> None


# ----------------------------------------------------------------------------
# Pure-JAX f32 reference for correctness checking
# ----------------------------------------------------------------------------
def reference(x_tbc, params):
    T, B, C = x_tbc.shape
    H = params["num_heads"]
    Dh = C // H
    eps = 1e-5
    x = x_tbc
    q = x @ params["wq"] + params["bq"]
    k = x @ params["wk"] + params["bk"]
    v = x @ params["wv"] + params["bv"]
    q = q * (Dh ** -0.5)
    rs = lambda t: t.reshape(T, B, H, Dh).transpose(1, 2, 0, 3)  # (B,H,T,Dh)
    qh, kh, vh = rs(q), rs(k), rs(v)
    s = jnp.einsum("bhtd,bhsd->bhts", qh, kh)
    p = jax.nn.softmax(s, axis=-1)
    o = jnp.einsum("bhts,bhsd->bhtd", p, vh)
    o = o.transpose(2, 0, 1, 3).reshape(T, B, C)
    o = o @ params["wo"] + params["bo"]
    y = x + o

    def ln(t, g, b):
        mu = jnp.mean(t, axis=-1, keepdims=True)
        var = jnp.mean((t - mu) ** 2, axis=-1, keepdims=True)
        return (t - mu) * lax.rsqrt(var + eps) * g + b

    yn = ln(y, params["g1"], params["be1"])
    h = jnp.maximum(yn @ params["w1"] + params["b1"], 0.0)
    z = h @ params["w2"] + params["b2"]
    z = yn + z
    return ln(z, params["g2"], params["be2"])


# ----------------------------------------------------------------------------
if __name__ == "__main__":
    # small shapes consistent with the module semantics
    T, B, C, H, F = 8, 2, 32, 4, 64

    key = jax.random.PRNGKey(0)
    ks = jax.random.split(key, 16)
    std = 0.05
    params = {
        "num_heads": H,
        "wq": std * jax.random.normal(ks[0], (C, C), jnp.float32),
        "wk": std * jax.random.normal(ks[1], (C, C), jnp.float32),
        "wv": std * jax.random.normal(ks[2], (C, C), jnp.float32),
        "bq": std * jax.random.normal(ks[3], (C,), jnp.float32),
        "bk": std * jax.random.normal(ks[4], (C,), jnp.float32),
        "bv": std * jax.random.normal(ks[5], (C,), jnp.float32),
        "wo": std * jax.random.normal(ks[6], (C, C), jnp.float32),
        "bo": std * jax.random.normal(ks[7], (C,), jnp.float32),
        "w1": std * jax.random.normal(ks[8], (C, F), jnp.float32),
        "b1": std * jax.random.normal(ks[9], (F,), jnp.float32),
        "w2": std * jax.random.normal(ks[10], (F, C), jnp.float32),
        "b2": std * jax.random.normal(ks[11], (C,), jnp.float32),
        "g1": 1.0 + 0.1 * jax.random.normal(ks[12], (C,), jnp.float32),
        "be1": 0.1 * jax.random.normal(ks[13], (C,), jnp.float32),
        "g2": 1.0 + 0.1 * jax.random.normal(ks[14], (C,), jnp.float32),
        "be2": 0.1 * jax.random.normal(ks[15], (C,), jnp.float32),
    }

    x = jax.random.normal(jax.random.PRNGKey(42), (T, B, C), jnp.float32)

    out, attn = transformer_sentence_encoder_layer(x, params)
    out = jax.block_until_ready(out)

    ref = jax.block_until_ready(reference(x, params))
    assert out.shape == (T, B, C)
    assert attn is None
    # bf16 MXU operands (f32 accumulation, f32 softmax & LN statistics) and
    # approx-reciprocal softmax denominator vs an f32 reference.
    assert jnp.allclose(out, ref, rtol=2e-2, atol=2e-2), (
        float(jnp.max(jnp.abs(out - ref))))

    print("KERNEL_OK")
</pallas_src>

<mosaic_0001>
module attributes {stable_mosaic.version = 11 : i64} {
  func.func @attention_kernel(%arg0: i32, %arg1: memref<1x8x32xf32, #tpu.memory_space<vmem>>, %arg2: memref<32x96xbf16, #tpu.memory_space<vmem>>, %arg3: memref<1x96xf32, #tpu.memory_space<vmem>>, %arg4: memref<32x32xbf16, #tpu.memory_space<vmem>>, %arg5: memref<1x32xf32, #tpu.memory_space<vmem>>, %arg6: memref<1x8x32xf32, #tpu.memory_space<vmem>>) attributes {dimension_semantics = [#tpu.dimension_semantics<parallel>], iteration_bounds = array<i64: 2>, scalar_prefetch = 0 : i64, scratch_operands = 0 : i64, tpu.core_type = #tpu.core_type<tc>, window_params = [{transform_indices = @transform_0, window_bounds = array<i64: 1, 8, 32>}, {pipeline_mode = #tpu.pipeline_mode<synchronous>, transform_indices = @transform_1, window_bounds = array<i64: 32, 96>}, {pipeline_mode = #tpu.pipeline_mode<synchronous>, transform_indices = @transform_2, window_bounds = array<i64: 1, 96>}, {pipeline_mode = #tpu.pipeline_mode<synchronous>, transform_indices = @transform_3, window_bounds = array<i64: 32, 32>}, {pipeline_mode = #tpu.pipeline_mode<synchronous>, transform_indices = @transform_4, window_bounds = array<i64: 1, 32>}, {transform_indices = @transform_5, window_bounds = array<i64: 1, 8, 32>}]} {
    %c0 = arith.constant 0 : index
    %c0_0 = arith.constant 0 : index
    %c0_1 = arith.constant 0 : index
    %0 = vector.load %arg1[%c0, %c0_0, %c0_1] : memref<1x8x32xf32, #tpu.memory_space<vmem>>, vector<1x8x32xf32>
    %1 = vector.shape_cast %0 : vector<1x8x32xf32> to vector<8x32xf32>
    %2 = arith.truncf %1 : vector<8x32xf32> to vector<8x32xbf16>
    %c0_2 = arith.constant 0 : index
    %c0_3 = arith.constant 0 : index
    %3 = vector.load %arg2[%c0_2, %c0_3] : memref<32x96xbf16, #tpu.memory_space<vmem>>, vector<32x96xbf16>
    %cst = arith.constant dense<0.000000e+00> : vector<8x96xf32>
    %4 = tpu.matmul %2, %3, %cst {dimension_numbers = #tpu.dot_dimension_numbers<[1], [0], [0], [1], [0, 0, 1, 1], [], []>} : vector<8x32xbf16>, vector<32x96xbf16>, vector<8x96xf32> -> vector<8x96xf32>
    %c0_4 = arith.constant 0 : index
    %c0_5 = arith.constant 0 : index
    %5 = vector.load %arg3[%c0_4, %c0_5] : memref<1x96xf32, #tpu.memory_space<vmem>>, vector<1x96xf32>
    %6 = vector.broadcast %5 : vector<1x96xf32> to vector<8x96xf32>
    %7 = arith.addf %4, %6 : vector<8x96xf32>
    %8 = vector.extract_strided_slice %7 {offsets = [0, 0], sizes = [8, 32], strides = [1, 1]} : vector<8x96xf32> to vector<8x32xf32>
    %9 = arith.truncf %8 : vector<8x32xf32> to vector<8x32xbf16>
    %10 = vector.extract_strided_slice %7 {offsets = [0, 32], sizes = [8, 32], strides = [1, 1]} : vector<8x96xf32> to vector<8x32xf32>
    %11 = arith.truncf %10 : vector<8x32xf32> to vector<8x32xbf16>
    %12 = vector.extract_strided_slice %7 {offsets = [0, 64], sizes = [8, 32], strides = [1, 1]} : vector<8x96xf32> to vector<8x32xf32>
    %13 = arith.truncf %12 : vector<8x32xf32> to vector<8x32xbf16>
    %14 = vector.extract_strided_slice %9 {offsets = [0, 0], sizes = [8, 8], strides = [1, 1]} : vector<8x32xbf16> to vector<8x8xbf16>
    %15 = vector.extract_strided_slice %11 {offsets = [0, 0], sizes = [8, 8], strides = [1, 1]} : vector<8x32xbf16> to vector<8x8xbf16>
    %16 = vector.extract_strided_slice %13 {offsets = [0, 0], sizes = [8, 8], strides = [1, 1]} : vector<8x32xbf16> to vector<8x8xbf16>
    %cst_6 = arith.constant dense<0.000000e+00> : vector<8x8xf32>
    %17 = tpu.matmul %14, %15, %cst_6 {dimension_numbers = #tpu.dot_dimension_numbers<[1], [1], [0], [0], [0, 0, 1, 0], [], []>} : vector<8x8xbf16>, vector<8x8xbf16>, vector<8x8xf32> -> vector<8x8xf32>
    %cst_7 = arith.constant dense<0xFF800000> : vector<8xf32>
    %18 = vector.multi_reduction <maximumf>, %17, %cst_7 [1] : vector<8x8xf32> to vector<8xf32>
    %19 = vector.shape_cast %18 : vector<8xf32> to vector<8x1xf32>
    %20 = vector.broadcast %19 : vector<8x1xf32> to vector<8x8xf32>
    %21 = arith.subf %17, %20 : vector<8x8xf32>
    %22 = math.exp %21 : vector<8x8xf32>
    %cst_8 = arith.constant dense<0.000000e+00> : vector<8xf32>
    %23 = vector.multi_reduction <add>, %22, %cst_8 [1] : vector<8x8xf32> to vector<8xf32>
    %24 = vector.shape_cast %23 : vector<8xf32> to vector<8x1xf32>
    %25 = tpu.reciprocal %24 {approx = true} : vector<8x1xf32> -> vector<8x1xf32>
    %26 = vector.broadcast %25 : vector<8x1xf32> to vector<8x8xf32>
    %27 = arith.mulf %22, %26 : vector<8x8xf32>
    %28 = arith.truncf %27 : vector<8x8xf32> to vector<8x8xbf16>
    %cst_9 = arith.constant dense<0.000000e+00> : vector<8x8xf32>
    %29 = tpu.matmul %28, %16, %cst_9 {dimension_numbers = #tpu.dot_dimension_numbers<[1], [0], [0], [1], [0, 0, 1, 1], [], []>} : vector<8x8xbf16>, vector<8x8xbf16>, vector<8x8xf32> -> vector<8x8xf32>
    %30 = arith.truncf %29 : vector<8x8xf32> to vector<8x8xbf16>
    %31 = vector.extract_strided_slice %9 {offsets = [0, 8], sizes = [8, 8], strides = [1, 1]} : vector<8x32xbf16> to vector<8x8xbf16>
    %32 = vector.extract_strided_slice %11 {offsets = [0, 8], sizes = [8, 8], strides = [1, 1]} : vector<8x32xbf16> to vector<8x8xbf16>
    %33 = vector.extract_strided_slice %13 {offsets = [0, 8], sizes = [8, 8], strides = [1, 1]} : vector<8x32xbf16> to vector<8x8xbf16>
    %cst_10 = arith.constant dense<0.000000e+00> : vector<8x8xf32>
    %34 = tpu.matmul %31, %32, %cst_10 {dimension_numbers = #tpu.dot_dimension_numbers<[1], [1], [0], [0], [0, 0, 1, 0], [], []>} : vector<8x8xbf16>, vector<8x8xbf16>, vector<8x8xf32> -> vector<8x8xf32>
    %cst_11 = arith.constant dense<0xFF800000> : vector<8xf32>
    %35 = vector.multi_reduction <maximumf>, %34, %cst_11 [1] : vector<8x8xf32> to vector<8xf32>
    %36 = vector.shape_cast %35 : vector<8xf32> to vector<8x1xf32>
    %37 = vector.broadcast %36 : vector<8x1xf32> to vector<8x8xf32>
    %38 = arith.subf %34, %37 : vector<8x8xf32>
    %39 = math.exp %38 : vector<8x8xf32>
    %cst_12 = arith.constant dense<0.000000e+00> : vector<8xf32>
    %40 = vector.multi_reduction <add>, %39, %cst_12 [1] : vector<8x8xf32> to vector<8xf32>
    %41 = vector.shape_cast %40 : vector<8xf32> to vector<8x1xf32>
    %42 = tpu.reciprocal %41 {approx = true} : vector<8x1xf32> -> vector<8x1xf32>
    %43 = vector.broadcast %42 : vector<8x1xf32> to vector<8x8xf32>
    %44 = arith.mulf %39, %43 : vector<8x8xf32>
    %45 = arith.truncf %44 : vector<8x8xf32> to vector<8x8xbf16>
    %cst_13 = arith.constant dense<0.000000e+00> : vector<8x8xf32>
    %46 = tpu.matmul %45, %33, %cst_13 {dimension_numbers = #tpu.dot_dimension_numbers<[1], [0], [0], [1], [0, 0, 1, 1], [], []>} : vector<8x8xbf16>, vector<8x8xbf16>, vector<8x8xf32> -> vector<8x8xf32>
    %47 = arith.truncf %46 : vector<8x8xf32> to vector<8x8xbf16>
    %48 = vector.extract_strided_slice %9 {offsets = [0, 16], sizes = [8, 8], strides = [1, 1]} : vector<8x32xbf16> to vector<8x8xbf16>
    %49 = vector.extract_strided_slice %11 {offsets = [0, 16], sizes = [8, 8], strides = [1, 1]} : vector<8x32xbf16> to vector<8x8xbf16>
    %50 = vector.extract_strided_slice %13 {offsets = [0, 16], sizes = [8, 8], strides = [1, 1]} : vector<8x32xbf16> to vector<8x8xbf16>
    %cst_14 = arith.constant dense<0.000000e+00> : vector<8x8xf32>
    %51 = tpu.matmul %48, %49, %cst_14 {dimension_numbers = #tpu.dot_dimension_numbers<[1], [1], [0], [0], [0, 0, 1, 0], [], []>} : vector<8x8xbf16>, vector<8x8xbf16>, vector<8x8xf32> -> vector<8x8xf32>
    %cst_15 = arith.constant dense<0xFF800000> : vector<8xf32>
    %52 = vector.multi_reduction <maximumf>, %51, %cst_15 [1] : vector<8x8xf32> to vector<8xf32>
    %53 = vector.shape_cast %52 : vector<8xf32> to vector<8x1xf32>
    %54 = vector.broadcast %53 : vector<8x1xf32> to vector<8x8xf32>
    %55 = arith.subf %51, %54 : vector<8x8xf32>
    %56 = math.exp %55 : vector<8x8xf32>
    %cst_16 = arith.constant dense<0.000000e+00> : vector<8xf32>
    %57 = vector.multi_reduction <add>, %56, %cst_16 [1] : vector<8x8xf32> to vector<8xf32>
    %58 = vector.shape_cast %57 : vector<8xf32> to vector<8x1xf32>
    %59 = tpu.reciprocal %58 {approx = true} : vector<8x1xf32> -> vector<8x1xf32>
    %60 = vector.broadcast %59 : vector<8x1xf32> to vector<8x8xf32>
    %61 = arith.mulf %56, %60 : vector<8x8xf32>
    %62 = arith.truncf %61 : vector<8x8xf32> to vector<8x8xbf16>
    %cst_17 = arith.constant dense<0.000000e+00> : vector<8x8xf32>
    %63 = tpu.matmul %62, %50, %cst_17 {dimension_numbers = #tpu.dot_dimension_numbers<[1], [0], [0], [1], [0, 0, 1, 1], [], []>} : vector<8x8xbf16>, vector<8x8xbf16>, vector<8x8xf32> -> vector<8x8xf32>
    %64 = arith.truncf %63 : vector<8x8xf32> to vector<8x8xbf16>
    %65 = vector.extract_strided_slice %9 {offsets = [0, 24], sizes = [8, 8], strides = [1, 1]} : vector<8x32xbf16> to vector<8x8xbf16>
    %66 = vector.extract_strided_slice %11 {offsets = [0, 24], sizes = [8, 8], strides = [1, 1]} : vector<8x32xbf16> to vector<8x8xbf16>
    %67 = vector.extract_strided_slice %13 {offsets = [0, 24], sizes = [8, 8], strides = [1, 1]} : vector<8x32xbf16> to vector<8x8xbf16>
    %cst_18 = arith.constant dense<0.000000e+00> : vector<8x8xf32>
    %68 = tpu.matmul %65, %66, %cst_18 {dimension_numbers = #tpu.dot_dimension_numbers<[1], [1], [0], [0], [0, 0, 1, 0], [], []>} : vector<8x8xbf16>, vector<8x8xbf16>, vector<8x8xf32> -> vector<8x8xf32>
    %cst_19 = arith.constant dense<0xFF800000> : vector<8xf32>
    %69 = vector.multi_reduction <maximumf>, %68, %cst_19 [1] : vector<8x8xf32> to vector<8xf32>
    %70 = vector.shape_cast %69 : vector<8xf32> to vector<8x1xf32>
    %71 = vector.broadcast %70 : vector<8x1xf32> to vector<8x8xf32>
    %72 = arith.subf %68, %71 : vector<8x8xf32>
    %73 = math.exp %72 : vector<8x8xf32>
    %cst_20 = arith.constant dense<0.000000e+00> : vector<8xf32>
    %74 = vector.multi_reduction <add>, %73, %cst_20 [1] : vector<8x8xf32> to vector<8xf32>
    %75 = vector.shape_cast %74 : vector<8xf32> to vector<8x1xf32>
    %76 = tpu.reciprocal %75 {approx = true} : vector<8x1xf32> -> vector<8x1xf32>
    %77 = vector.broadcast %76 : vector<8x1xf32> to vector<8x8xf32>
    %78 = arith.mulf %73, %77 : vector<8x8xf32>
    %79 = arith.truncf %78 : vector<8x8xf32> to vector<8x8xbf16>
    %cst_21 = arith.constant dense<0.000000e+00> : vector<8x8xf32>
    %80 = tpu.matmul %79, %67, %cst_21 {dimension_numbers = #tpu.dot_dimension_numbers<[1], [0], [0], [1], [0, 0, 1, 1], [], []>} : vector<8x8xbf16>, vector<8x8xbf16>, vector<8x8xf32> -> vector<8x8xf32>
    %81 = arith.truncf %80 : vector<8x8xf32> to vector<8x8xbf16>
    %82 = tpu.concatenate %30, %47, %64, %81 in 1 : vector<8x8xbf16>, vector<8x8xbf16>, vector<8x8xbf16>, vector<8x8xbf16> -> vector<8x32xbf16>
    %c0_22 = arith.constant 0 : index
    %c0_23 = arith.constant 0 : index
    %83 = vector.load %arg4[%c0_22, %c0_23] : memref<32x32xbf16, #tpu.memory_space<vmem>>, vector<32x32xbf16>
    %cst_24 = arith.constant dense<0.000000e+00> : vector<8x32xf32>
    %84 = tpu.matmul %82, %83, %cst_24 {dimension_numbers = #tpu.dot_dimension_numbers<[1], [0], [0], [1], [0, 0, 1, 1], [], []>} : vector<8x32xbf16>, vector<32x32xbf16>, vector<8x32xf32> -> vector<8x32xf32>
    %c0_25 = arith.constant 0 : index
    %c0_26 = arith.constant 0 : index
    %85 = vector.load %arg5[%c0_25, %c0_26] : memref<1x32xf32, #tpu.memory_space<vmem>>, vector<1x32xf32>
    %86 = vector.broadcast %85 : vector<1x32xf32> to vector<8x32xf32>
    %87 = arith.addf %84, %86 : vector<8x32xf32>
    %88 = arith.addf %1, %87 : vector<8x32xf32>
    %c0_27 = arith.constant 0 : index
    %c0_28 = arith.constant 0 : index
    %c0_29 = arith.constant 0 : index
    %89 = vector.load %arg6[%c0_27, %c0_28, %c0_29] : memref<1x8x32xf32, #tpu.memory_space<vmem>>, vector<1x8x32xf32>
    %90 = vector.shape_cast %89 : vector<1x8x32xf32> to vector<8x32xf32>
    %91 = vector.shape_cast %88 : vector<8x32xf32> to vector<1x8x32xf32>
    tpu.vector_store %arg6[%c0_27, %c0_28, %c0_29], %91 {strides = array<i32>} : memref<1x8x32xf32, #tpu.memory_space<vmem>>, vector<1x8x32xf32>,
    return
  }
  func.func @transform_0(%arg0: i32) -> (i32, i32, i32) {
    %c0_i32 = arith.constant 0 : i32
    %c0_i32_0 = arith.constant 0 : i32
    %c0_i32_1 = arith.constant 0 : i32
    return %arg0, %c0_i32, %c0_i32_0 : i32, i32, i32
  }
  func.func @transform_1(%arg0: i32) -> (i32, i32) {
    %c0_i32 = arith.constant 0 : i32
    %c0_i32_0 = arith.constant 0 : i32
    %c0_i32_1 = arith.constant 0 : i32
    return %c0_i32, %c0_i32_0 : i32, i32
  }
  func.func @transform_2(%arg0: i32) -> (i32, i32) {
    %c0_i32 = arith.constant 0 : i32
    %c0_i32_0 = arith.constant 0 : i32
    %c0_i32_1 = arith.constant 0 : i32
    return %c0_i32, %c0_i32_0 : i32, i32
  }
  func.func @transform_3(%arg0: i32) -> (i32, i32) {
    %c0_i32 = arith.constant 0 : i32
    %c0_i32_0 = arith.constant 0 : i32
    %c0_i32_1 = arith.constant 0 : i32
    return %c0_i32, %c0_i32_0 : i32, i32
  }
  func.func @transform_4(%arg0: i32) -> (i32, i32) {
    %c0_i32 = arith.constant 0 : i32
    %c0_i32_0 = arith.constant 0 : i32
    %c0_i32_1 = arith.constant 0 : i32
    return %c0_i32, %c0_i32_0 : i32, i32
  }
  func.func @transform_5(%arg0: i32) -> (i32, i32, i32) {
    %c0_i32 = arith.constant 0 : i32
    %c0_i32_0 = arith.constant 0 : i32
    %c0_i32_1 = arith.constant 0 : i32
    return %arg0, %c0_i32, %c0_i32_0 : i32, i32, i32
  }
}

</mosaic_0001>

<llo_original>
// kernel: tpu_custom_call.1
$region0: #{tpu_custom_call.1}
  #allocation0 [shape = 'u32[]', space=smem, size = 0x4, offset = 0x4, fixed_abs, tag = 'smem constant byte address 0x4 - core index']
  #allocation1 [shape = 'u32[72,128]{1,0:T(1,128)}', space=vmem, size = 0x9000, scoped, tag = 'internal scratch']
  %s0 = inlined_call_operand.hbm [shape: f32[2,8,32], index: 0, kind: input, shape index: {}]
  %s1 = inlined_call_operand.hbm [shape: bf16[32,96], index: 1, kind: input, shape index: {}]
  %s2 = inlined_call_operand.vmem [shape: f32[1,96], index: 2, kind: input, shape index: {}]
  %s3 = inlined_call_operand.hbm [shape: bf16[32,32], index: 3, kind: input, shape index: {}]
  %s4 = inlined_call_operand.vmem [shape: f32[1,32], index: 4, kind: input, shape index: {}]
  %s5 = inlined_call_operand.hbm [shape: f32[2,8,32], index: 5, kind: output, shape index: {}]
  %s6 = sld [smem:[#allocation0]]
  $region65: #{tpu_custom_call.1} parent=0
    _
  %s8 = ssub.s32 1, %s6
  %s9 = scalar_select 0, %s8, %s6
  $region1: #{tpu_custom_call.1} parent=0
    #allocation2 [shape = 'u8[8192]{0}', space=vmem, size = 0x2000, scoped, tag = 'input window, operand 0']
    #allocation3 [shape = 's32[2]{0}', space=sflag, size = 0x8, scoped, tag = 'scoped memory for tpu_custom_call.1']
    #allocation4 [shape = 's32[2]{0}', space=sflag, size = 0x8, scoped, tag = 'scoped memory for tpu_custom_call.1']
    #allocation5 [shape = 'u8[8192]{0}', space=vmem, size = 0x2000, scoped, tag = 'input window, operand 1, single buffered']
    #allocation6 [shape = 's32[1]{0}', space=sflag, size = 0x4, scoped, tag = 'scoped memory for tpu_custom_call.1']
    #allocation7 [shape = 'u8[8192]{0}', space=vmem, size = 0x2000, scoped, tag = 'input window, operand 3, single buffered']
    #allocation8 [shape = 'u8[8192]{0}', space=vmem, size = 0x2000, scoped, tag = 'output window, operand 0']
    %10 = vsyncpa [#allocation3], 0
    %s11 = scalar_lea.sflag [#allocation3], 1
    %12 = vsyncpa %s11, 0
    %13 = vsyncpa [#allocation6], 0
    %14 = vsyncpa [#allocation4], 0
    %s15 = scalar_lea.sflag [#allocation4], 1
    %16 = vsyncpa %s15, 0
    loop: start=0, step=1, limit=4
    $region2: #{tpu_custom_call.1} parent=1 // loop_pre_header
      _
    $region3: #{tpu_custom_call.1} parent=1 // loop_header
      %s18 = sphi 0, %s22
      %p19 = scmp.ge.s32.totalorder %s18, 4
      %s28 = sphi 0, %s30
      %s31 = sphi 0, %s28
      %s32 = sphi 0, %s31
      %s48 = sphi 0, %s32
      %s52 = sphi 0, %s52
      %s54 = sphi 0, %s52
      %s55 = sphi 0, %s54
      %s69 = sphi 0, %s55
      %s73 = sphi 0, %s73
      %s75 = sphi 0, %s73
      %s76 = sphi 0, %s75
      %s90 = sphi 0, %s76
      %s94 = sphi 0, %s94
      %s96 = sphi 0, %s94
      %s97 = sphi 0, %s96
      %s111 = sphi 0, %s97
      %s115 = sphi 0, %s115
      %s117 = sphi 0, %s115
      %s118 = sphi 0, %s117
      %s132 = sphi 0, %s118
      %s138 = sphi 0, %s140
      %s141 = sphi 0, %s138
      %s142 = sphi 0, %s141
      %s158 = sphi 0, %s142
    $region4: #{tpu_custom_call.1} parent=1 // loop_header_branch
      %21 = sbr.rel (%p19) target = $region8
    $region5: #{tpu_custom_call.1} parent=1 // loop_body
      %s23 = ssub.s32 %s18, 1
      %s24 = ssub.s32 %s18, 2
      %s25 = sadd.s32 %s18, 1
      %s26 = ssub.s32 %s18, %s25
      %p27 = scmp.eq.s32.totalorder %s26, 0
      %s29 = sadd.s32 %s28, 1
      %s30 = scalar_select %p27, %s28, %s29
      %p33 = pneg %p27
      %p34 = scmp.eq.s32.totalorder %s18, 1
      %p35 = por %p33, %p34
      %p36 = scmp.ne.s32.totalorder %s28, %s31
      %p37 = scmp.eq.s32.totalorder %s18, 0
      %p38 = por %p36, %p37
      %p39 = scmp.ne.s32.totalorder %s28, %s31
      %p40 = scmp.eq.s32.totalorder %s23, 1
      %p41 = por %p39, %p40
      %p42 = scmp.ne.s32.totalorder %s31, %s32
      %p43 = scmp.eq.s32.totalorder %s23, 0
      %p44 = por %p42, %p43
      %p45 = scmp.ne.s32.totalorder %s31, %s32
      %p46 = scmp.eq.s32.totalorder %s24, 1
      %p47 = por %p45, %p46
      %p49 = scmp.ne.s32.totalorder %s32, %s48
      %p50 = scmp.eq.s32.totalorder %s24, 0
      %p51 = por %p49, %p50
      %s53 = sadd.s32 %s52, 1
      %p56 = scmp.eq.s32.totalorder %s18, 1
      %p57 = scmp.ne.s32.totalorder %s52, %s54
      %p58 = scmp.eq.s32.totalorder %s18, 0
      %p59 = por %p57, %p58
      %p60 = scmp.ne.s32.totalorder %s52, %s54
      %p61 = scmp.eq.s32.totalorder %s23, 1
      %p62 = por %p60, %p61
      %p63 = scmp.ne.s32.totalorder %s54, %s55
      %p64 = scmp.eq.s32.totalorder %s23, 0
      %p65 = por %p63, %p64
      %p66 = scmp.ne.s32.totalorder %s54, %s55
      %p67 = scmp.eq.s32.totalorder %s24, 1
      %p68 = por %p66, %p67
      %p70 = scmp.ne.s32.totalorder %s55, %s69
      %p71 = scmp.eq.s32.totalorder %s24, 0
      %p72 = por %p70, %p71
      %s74 = sadd.s32 %s73, 1
      %p77 = scmp.eq.s32.totalorder %s18, 1
      %p78 = scmp.ne.s32.totalorder %s73, %s75
      %p79 = scmp.eq.s32.totalorder %s18, 0
      %p80 = por %p78, %p79
      %p81 = scmp.ne.s32.totalorder %s73, %s75
      %p82 = scmp.eq.s32.totalorder %s23, 1
      %p83 = por %p81, %p82
      %p84 = scmp.ne.s32.totalorder %s75, %s76
      %p85 = scmp.eq.s32.totalorder %s23, 0
      %p86 = por %p84, %p85
      %p87 = scmp.ne.s32.totalorder %s75, %s76
      %p88 = scmp.eq.s32.totalorder %s24, 1
      %p89 = por %p87, %p88
      %p91 = scmp.ne.s32.totalorder %s76, %s90
      %p92 = scmp.eq.s32.totalorder %s24, 0
      %p93 = por %p91, %p92
      %s95 = sadd.s32 %s94, 1
      %p98 = scmp.eq.s32.totalorder %s18, 1
      %p99 = scmp.ne.s32.totalorder %s94, %s96
      %p100 = scmp.eq.s32.totalorder %s18, 0
      %p101 = por %p99, %p100
      %p102 = scmp.ne.s32.totalorder %s94, %s96
      %p103 = scmp.eq.s32.totalorder %s23, 1
      %p104 = por %p102, %p103
      %p105 = scmp.ne.s32.totalorder %s96, %s97
      %p106 = scmp.eq.s32.totalorder %s23, 0
      %p107 = por %p105, %p106
      %p108 = scmp.ne.s32.totalorder %s96, %s97
      %p109 = scmp.eq.s32.totalorder %s24, 1
      %p110 = por %p108, %p109
      %p112 = scmp.ne.s32.totalorder %s97, %s111
      %p113 = scmp.eq.s32.totalorder %s24, 0
      %p114 = por %p112, %p113
      %s116 = sadd.s32 %s115, 1
      %p119 = scmp.eq.s32.totalorder %s18, 1
      %p120 = scmp.ne.s32.totalorder %s115, %s117
      %p121 = scmp.eq.s32.totalorder %s18, 0
      %p122 = por %p120, %p121
      %p123 = scmp.ne.s32.totalorder %s115, %s117
      %p124 = scmp.eq.s32.totalorder %s23, 1
      %p125 = por %p123, %p124
      %p126 = scmp.ne.s32.totalorder %s117, %s118
      %p127 = scmp.eq.s32.totalorder %s23, 0
      %p128 = por %p126, %p127
      %p129 = scmp.ne.s32.totalorder %s117, %s118
      %p130 = scmp.eq.s32.totalorder %s24, 1
      %p131 = por %p129, %p130
      %p133 = scmp.ne.s32.totalorder %s118, %s132
      %p134 = scmp.eq.s32.totalorder %s24, 0
      %p135 = por %p133, %p134
      %s136 = ssub.s32 %s18, %s25
      %p137 = scmp.eq.s32.totalorder %s136, 0
      %s139 = sadd.s32 %s138, 1
      %s140 = scalar_select %p137, %s138, %s139
      %p143 = pneg %p137
      %p144 = scmp.eq.s32.totalorder %s18, 1
      %p145 = por %p143, %p144
      %p146 = scmp.ne.s32.totalorder %s138, %s141
      %p147 = scmp.eq.s32.totalorder %s18, 0
      %p148 = por %p146, %p147
      %p149 = scmp.ne.s32.totalorder %s138, %s141
      %p150 = scmp.eq.s32.totalorder %s23, 1
      %p151 = por %p149, %p150
      %p152 = scmp.ne.s32.totalorder %s141, %s142
      %p153 = scmp.eq.s32.totalorder %s23, 0
      %p154 = por %p152, %p153
      %p155 = scmp.ne.s32.totalorder %s141, %s142
      %p156 = scmp.eq.s32.totalorder %s24, 1
      %p157 = por %p155, %p156
      %p159 = scmp.ne.s32.totalorder %s142, %s158
      %p160 = scmp.eq.s32.totalorder %s24, 0
      %p161 = por %p159, %p160
      %p162 = scmp.le.s32.totalorder 1, %s18
      %p163 = scmp.lt.s32.totalorder %s18, 3
      %p164 = pnand %p162, %p163
      %p165 = pneg %p164
      // Predicated region
      $region9: #{tpu_custom_call.1} parent=5 // pred_check
        _
      $region10: #{tpu_custom_call.1} parent=5 // pred_check_branch
        %167 = sbr.rel (%p164) target = $region12
      $region11: #{tpu_custom_call.1} parent=5 // pred_region
        %s168 = ssub.s32 %s18, 1
        // Predicated region
        $region13: #{tpu_custom_call.1} parent=11 // pred_check
          %p169 = pneg %p65
        $region14: #{tpu_custom_call.1} parent=11 // pred_check_branch
          %171 = sbr.rel (%p169) target = $region16
        $region15: #{tpu_custom_call.1} parent=11 // pred_region
          %173 = vsyncadd [#allocation6], 0
          %s174 = sshll.u32 %s1, 4
          %s175 = int_to_ptr.hbm [resolvable:$true] %s174
          %s176 = sshll.u32 [#allocation5], 4
          %s177 = int_to_ptr.vmem [resolvable:$true] %s176
          %182 = dma.hbm_to_vmem [thread:$0]  %s175, 256, %s177, [#allocation6], 64, 64, 4
        $region16: #{tpu_custom_call.1} parent=11 // pred_fallthru
          _
        // Predicated region
        $region17: #{tpu_custom_call.1} parent=11 // pred_check
          %p183 = pneg %p86
        $region18: #{tpu_custom_call.1} parent=11 // pred_check_branch
          %185 = sbr.rel (%p183) target = $region20
        $region19: #{tpu_custom_call.1} parent=11 // pred_region
          _
        $region20: #{tpu_custom_call.1} parent=11 // pred_fallthru
          _
        // Predicated region
        $region21: #{tpu_custom_call.1} parent=11 // pred_check
          %p186 = pneg %p107
        $region22: #{tpu_custom_call.1} parent=11 // pred_check_branch
          %188 = sbr.rel (%p186) target = $region24
        $region23: #{tpu_custom_call.1} parent=11 // pred_region
          %190 = vsyncadd [#allocation6], 0
          %s191 = sshll.u32 %s3, 4
          %s192 = int_to_ptr.hbm [resolvable:$true] %s191
          %s193 = sshll.u32 [#allocation7], 4
          %s194 = int_to_ptr.vmem [resolvable:$true] %s193
          %199 = dma.hbm_to_vmem [thread:$0]  %s192, 256, %s194, [#allocation6], 64, 64, 4
        $region24: #{tpu_custom_call.1} parent=11 // pred_fallthru
          _
        // Predicated region
        $region25: #{tpu_custom_call.1} parent=11 // pred_check
          %p200 = pneg %p128
        $region26: #{tpu_custom_call.1} parent=11 // pred_check_branch
          %202 = sbr.rel (%p200) target = $region28
        $region27: #{tpu_custom_call.1} parent=11 // pred_region
          _
        $region28: #{tpu_custom_call.1} parent=11 // pred_fallthru
          _
      $region12: #{tpu_custom_call.1} parent=5 // pred_fallthru
        _
      %p203 = scmp.lt.s32.totalorder %s18, 2
      // Predicated region
      $region29: #{tpu_custom_call.1} parent=5 // pred_check
        %p204 = pneg %p203
      $region30: #{tpu_custom_call.1} parent=5 // pred_check_branch
        %206 = sbr.rel (%p204) target = $region32
      $region31: #{tpu_custom_call.1} parent=5 // pred_region
        // Predicated region
        $region33: #{tpu_custom_call.1} parent=31 // pred_check
          %p207 = pneg %p38
        $region34: #{tpu_custom_call.1} parent=31 // pred_check_branch
          %209 = sbr.rel (%p207) target = $region36
        $region35: #{tpu_custom_call.1} parent=31 // pred_region
          %s210 = sand.u32 %s28, 1
          %s211 = scalar_lea.sflag [#allocation3], %s210
          %s212 = sand.u32 %s28, 1
          %s213 = smul.addr %s212, 8
          %s214 = scalar_lea.vmem [#allocation2], %s213
          %216 = vsyncadd %s211, 0
          %s217 = smul.addr %s18, 8
          %s218 = scalar_lea.hbm %s0, %s217
          %s220 = sshll.u32 %s218, 4
          %s221 = int_to_ptr.hbm [resolvable:$true] %s220
          %s222 = sshll.u32 %s214, 4
          %s223 = int_to_ptr.vmem [resolvable:$true] %s222
          %225 = dma.hbm_to_vmem [thread:$0]  %s221, 128, %s223, %s211
        $region36: #{tpu_custom_call.1} parent=31 // pred_fallthru
          _
      $region32: #{tpu_custom_call.1} parent=5 // pred_fallthru
        _
      %p226 = scmp.le.s32.totalorder 1, %s18
      %p227 = scmp.lt.s32.totalorder %s18, 3
      %p228 = pnand %p226, %p227
      %p229 = pneg %p228
      // Predicated region
      $region37: #{tpu_custom_call.1} parent=5 // pred_check
        _
      $region38: #{tpu_custom_call.1} parent=5 // pred_check_branch
        %231 = sbr.rel (%p228) target = $region40
      $region39: #{tpu_custom_call.1} parent=5 // pred_region
        %s232 = ssub.s32 %s18, 1
        %s233 = sand.u32 %s31, 1
        %s234 = scalar_lea.sflag [#allocation3], %s233
        %s235 = sand.u32 %s31, 1
        %s236 = smul.addr %s235, 8
        %s237 = scalar_lea.vmem [#allocation2], %s236
        // Predicated region
        $region41: #{tpu_custom_call.1} parent=39 // pred_check
          %p238 = pneg %p44
        $region42: #{tpu_custom_call.1} parent=39 // pred_check_branch
          %240 = sbr.rel (%p238) target = $region44
        $region43: #{tpu_custom_call.1} parent=39 // pred_region
          %242 = dma.done %s234, 128
        $region44: #{tpu_custom_call.1} parent=39 // pred_fallthru
          _
        // Predicated region
        $region45: #{tpu_custom_call.1} parent=39 // pred_check
          %p243 = pneg %p65
        $region46: #{tpu_custom_call.1} parent=39 // pred_check_branch
          %245 = sbr.rel (%p243) target = $region48
        $region47: #{tpu_custom_call.1} parent=39 // pred_region
          %247 = dma.done [#allocation6], 256
        $region48: #{tpu_custom_call.1} parent=39 // pred_fallthru
          _
        // Predicated region
        $region49: #{tpu_custom_call.1} parent=39 // pred_check
          %p248 = pneg %p107
        $region50: #{tpu_custom_call.1} parent=39 // pred_check_branch
          %250 = sbr.rel (%p248) target = $region52
        $region51: #{tpu_custom_call.1} parent=39 // pred_region
          %252 = dma.done [#allocation6], 256
        $region52: #{tpu_custom_call.1} parent=39 // pred_fallthru
          _
        %s253 = sand.u32 %s31, 1
        %s254 = scalar_lea.sflag [#allocation3], %s253
        %s255 = sand.u32 %s31, 1
        %s256 = smul.addr %s255, 8
        %s257 = scalar_lea.vmem [#allocation2], %s256
        %p258 = pneg %p44
        %p259 = pneg %p41
        %p260 = pneg %p65
        %p261 = pneg %p62
        %p262 = pneg %p86
        %p263 = pneg %p83
        %p264 = pneg %p107
        %p265 = pneg %p104
        %p266 = pneg %p128
        %p267 = pneg %p125
        %p268 = pneg %p154
        %p269 = pneg %p151
        %s270 = sand.u32 %s141, 1
        %s271 = scalar_lea.sflag [#allocation4], %s270
        %s272 = sand.u32 %s141, 1
        %s273 = smul.addr %s272, 8
        %s274 = scalar_lea.vmem [#allocation8], %s273
        %v276 = vld [vmem:[%s237] sm:$0xff]
        %v277 = vpack.c.bf16 %v276, %v276
        %v278 = vld [vmem:[#allocation5] sm:$0xf]
        %v279 = vld [vmem:[#allocation5 + $0x4] sm:$0xf]
        %v280 = vld [vmem:[#allocation5 + $0x8] sm:$0xf]
        %v281 = vld [vmem:[#allocation5 + $0xc] sm:$0xf]
        %v282 = vld [vmem:[%s2] sm:$0x1]
        %v284 = vperm.slane %v282, 0
        %v290 = vunpack.c.l.b16 %v278
        %v291 = vunpack.c.l.b16 %v279
        %v292 = vunpack.c.l.b16 %v280
        %v293 = vunpack.c.l.b16 %v281
        %v294 = vpack.c.b16 %v291, %v290
        %v295 = vpack.c.b16 %v293, %v292
        %vm298 = vcmask 261120
        %v300 = vsel %vm298, %v277, 0
        %302 = vmatpush.bf16.msra.mxu0 0
        %303 = vmatpush.bf16.msra.mxu0 0
        %304 = vmatpush.bf16.msra.mxu0 0
        %305 = vmatpush.bf16.msra.mxu0 0
        %306 = vmatpush.bf16.msra.mxu0 0
        %307 = vmatpush.bf16.msra.mxu0 0
        %308 = vmatpush.bf16.msra.mxu0 %v295
        %309 = vmatpush.bf16.msra.mxu0 %v294
        %310 = vmatmul.bf16.gmra.mxu0 %v300
        %v311 = vpop.f32.mrf.mxu0
        %v312 = vadd.f32 %v284, %v311
        %v313 = vpop.f32.mrf.mxu0
        %314 = vdwg.mxu0
        %v315 = vpack.c.bf16 %v312, %v312
        %v317 = vunpack.c.l.b16 %v315
        %v318 = vpack.c.b16 %v317, %v317
        %319 = vrot.lane.b32.xlu0 %v318, 96
        %v320 = vpop.permute.xlu0 %319
        %vm321 = vcmask 64512
        %v323 = vsel %vm321, %v315, 0
        %v326 = vsel %vm321, %v320, 0
        %328 = vmatpush.bf16.xpose.msra.mxu0 0
        %329 = vmatpush.bf16.xpose.msra.mxu0 0
        %330 = vmatpush.bf16.xpose.msra.mxu0 0
        %331 = vmatpush.bf16.xpose.msra.mxu0 0
        %332 = vmatpush.bf16.xpose.msra.mxu0 0
        %333 = vmatpush.bf16.xpose.msra.mxu0 0
        %334 = vmatpush.bf16.xpose.msra.mxu0 0
        %335 = vmatpush.bf16.xpose.msra.mxu0 %v326
        %336 = vmatmul.bf16.gmra.mxu0 %v323
        %v337 = vpop.f32.mrf.mxu0
        %v338 = vadd.f32 0.0, %v337
        %v339 = vpop.f32.mrf.mxu0
        %340 = vdwg.mxu0
        %v341 = vsel %vm321, %v338, -inf
        %342 = vmax.xlane.f32.xlu0 %v341
        %v343 = vpop.xlane.xlu0 %342
        %v344 = vsub.f32 %v338, %v343
        %v345 = vmul.f32 %v344, 1.442695
        %v346 = vpow.pop %v345
        %v347 = vsel %vm321, %v346, 0.0
        %348 = vadd.xlane.f32.xlu0 %v347
        %v349 = vpop.xlane.xlu0 %348
        %v350 = vrcp.pop %v349
        %v351 = vmul.f32 %v346, %v350
        %v352 = vpack.c.bf16 %v351, %v351
        %353 = vrot.lane.b32.xlu0 %v318, 64
        %v354 = vpop.permute.xlu0 %353
        %v356 = vsel %vm321, %v352, 0
        %vm358 = vcmask 1043456
        %v360 = vsel %vm358, %v354, 0
        %362 = vmatpush.bf16.msra.mxu0 0
        %363 = vmatpush.bf16.msra.mxu0 0
        %364 = vmatpush.bf16.msra.mxu0 0
        %365 = vmatpush.bf16.msra.mxu0 0
        %366 = vmatpush.bf16.msra.mxu0 0
        %367 = vmatpush.bf16.msra.mxu0 0
        %368 = vmatpush.bf16.msra.mxu0 0
        %369 = vmatpush.bf16.msra.mxu0 %v360
        %370 = vmatmul.bf16.gmra.mxu0 %v356
        %v371 = vpop.f32.mrf.mxu0
        %v372 = vadd.f32 0.0, %v371
        %v373 = vpop.f32.mrf.mxu0
        %374 = vdwg.mxu0
        %v375 = vpack.c.bf16 %v372, %v372
        %376 = vrot.lane.b32.xlu0 %v318, 120
        %v377 = vpop.permute.xlu0 %376
        %378 = vrot.lane.b32.xlu0 %v318, 88
        %v379 = vpop.permute.xlu0 %378
        %v381 = vsel %vm321, %v377, 0
        %v384 = vsel %vm321, %v379, 0
        %386 = vmatpush.bf16.xpose.msra.mxu0 0
        %387 = vmatpush.bf16.xpose.msra.mxu0 0
        %388 = vmatpush.bf16.xpose.msra.mxu0 0
        %389 = vmatpush.bf16.xpose.msra.mxu0 0
        %390 = vmatpush.bf16.xpose.msra.mxu0 0
        %391 = vmatpush.bf16.xpose.msra.mxu0 0
        %392 = vmatpush.bf16.xpose.msra.mxu0 0
        %393 = vmatpush.bf16.xpose.msra.mxu0 %v384
        %394 = vmatmul.bf16.gmra.mxu0 %v381
        %v395 = vpop.f32.mrf.mxu0
        %v396 = vadd.f32 0.0, %v395
        %v397 = vpop.f32.mrf.mxu0
        %398 = vdwg.mxu0
        %v399 = vsel %vm321, %v396, -inf
        %400 = vmax.xlane.f32.xlu0 %v399
        %v401 = vpop.xlane.xlu0 %400
        %v402 = vsub.f32 %v396, %v401
        %v403 = vmul.f32 %v402, 1.442695
        %v404 = vpow.pop %v403
        %v405 = vsel %vm321, %v404, 0.0
        %406 = vadd.xlane.f32.xlu0 %v405
        %v407 = vpop.xlane.xlu0 %406
        %v408 = vrcp.pop %v407
        %v409 = vmul.f32 %v404, %v408
        %v410 = vpack.c.bf16 %v409, %v409
        %411 = vrot.lane.b32.xlu0 %v318, 56
        %v412 = vpop.permute.xlu0 %411
        %v414 = vsel %vm321, %v410, 0
        %v417 = vsel %vm358, %v412, 0
        %419 = vmatpush.bf16.msra.mxu0 0
        %420 = vmatpush.bf16.msra.mxu0 0
        %421 = vmatpush.bf16.msra.mxu0 0
        %422 = vmatpush.bf16.msra.mxu0 0
        %423 = vmatpush.bf16.msra.mxu0 0
        %424 = vmatpush.bf16.msra.mxu0 0
        %425 = vmatpush.bf16.msra.mxu0 0
        %426 = vmatpush.bf16.msra.mxu0 %v417
        %427 = vmatmul.bf16.gmra.mxu0 %v414
        %v428 = vpop.f32.mrf.mxu0
        %v429 = vadd.f32 0.0, %v428
        %v430 = vpop.f32.mrf.mxu0
        %431 = vdwg.mxu0
        %v432 = vpack.c.bf16 %v429, %v429
        %433 = vrot.lane.b32.xlu0 %v318, 112
        %v434 = vpop.permute.xlu0 %433
        %435 = vrot.lane.b32.xlu0 %v318, 80
        %v436 = vpop.permute.xlu0 %435
        %v438 = vsel %vm321, %v434, 0
        %v441 = vsel %vm321, %v436, 0
        %443 = vmatpush.bf16.xpose.msra.mxu0 0
        %444 = vmatpush.bf16.xpose.msra.mxu0 0
        %445 = vmatpush.bf16.xpose.msra.mxu0 0
        %446 = vmatpush.bf16.xpose.msra.mxu0 0
        %447 = vmatpush.bf16.xpose.msra.mxu0 0
        %448 = vmatpush.bf16.xpose.msra.mxu0 0
        %449 = vmatpush.bf16.xpose.msra.mxu0 0
        %450 = vmatpush.bf16.xpose.msra.mxu0 %v441
        %451 = vmatmul.bf16.gmra.mxu0 %v438
        %v452 = vpop.f32.mrf.mxu0
        %v453 = vadd.f32 0.0, %v452
        %v454 = vpop.f32.mrf.mxu0
        %455 = vdwg.mxu0
        %v456 = vsel %vm321, %v453, -inf
        %457 = vmax.xlane.f32.xlu0 %v456
        %v458 = vpop.xlane.xlu0 %457
        %v459 = vsub.f32 %v453, %v458
        %v460 = vmul.f32 %v459, 1.442695
        %v461 = vpow.pop %v460
        %v462 = vsel %vm321, %v461, 0.0
        %463 = vadd.xlane.f32.xlu0 %v462
        %v464 = vpop.xlane.xlu0 %463
        %v465 = vrcp.pop %v464
        %v466 = vmul.f32 %v461, %v465
        %v467 = vpack.c.bf16 %v466, %v466
        %468 = vrot.lane.b32.xlu0 %v318, 48
        %v469 = vpop.permute.xlu0 %468
        %v471 = vsel %vm321, %v467, 0
        %v474 = vsel %vm358, %v469, 0
        %476 = vmatpush.bf16.msra.mxu0 0
        %477 = vmatpush.bf16.msra.mxu0 0
        %478 = vmatpush.bf16.msra.mxu0 0
        %479 = vmatpush.bf16.msra.mxu0 0
        %480 = vmatpush.bf16.msra.mxu0 0
        %481 = vmatpush.bf16.msra.mxu0 0
        %482 = vmatpush.bf16.msra.mxu0 0
        %483 = vmatpush.bf16.msra.mxu0 %v474
        %484 = vmatmul.bf16.gmra.mxu0 %v471
        %v485 = vpop.f32.mrf.mxu0
        %v486 = vadd.f32 0.0, %v485
        %v487 = vpop.f32.mrf.mxu0
        %488 = vdwg.mxu0
        %v489 = vpack.c.bf16 %v486, %v486
        %490 = vrot.lane.b32.xlu0 %v318, 104
        %v491 = vpop.permute.xlu0 %490
        %492 = vrot.lane.b32.xlu0 %v318, 72
        %v493 = vpop.permute.xlu0 %492
        %v495 = vsel %vm321, %v491, 0
        %v498 = vsel %vm321, %v493, 0
        %500 = vmatpush.bf16.xpose.msra.mxu0 0
        %501 = vmatpush.bf16.xpose.msra.mxu0 0
        %502 = vmatpush.bf16.xpose.msra.mxu0 0
        %503 = vmatpush.bf16.xpose.msra.mxu0 0
        %504 = vmatpush.bf16.xpose.msra.mxu0 0
        %505 = vmatpush.bf16.xpose.msra.mxu0 0
        %506 = vmatpush.bf16.xpose.msra.mxu0 0
        %507 = vmatpush.bf16.xpose.msra.mxu0 %v498
        %508 = vmatmul.bf16.gmra.mxu0 %v495
        %v509 = vpop.f32.mrf.mxu0
        %v510 = vadd.f32 0.0, %v509
        %v511 = vpop.f32.mrf.mxu0
        %512 = vdwg.mxu0
        %v513 = vsel %vm321, %v510, -inf
        %514 = vmax.xlane.f32.xlu0 %v513
        %v515 = vpop.xlane.xlu0 %514
        %v516 = vsub.f32 %v510, %v515
        %v517 = vmul.f32 %v516, 1.442695
        %v518 = vpow.pop %v517
        %v519 = vsel %vm321, %v518, 0.0
        %520 = vadd.xlane.f32.xlu0 %v519
        %v521 = vpop.xlane.xlu0 %520
        %v522 = vrcp.pop %v521
        %v523 = vmul.f32 %v518, %v522
        %v524 = vpack.c.bf16 %v523, %v523
        %525 = vrot.lane.b32.xlu0 %v318, 40
        %v526 = vpop.permute.xlu0 %525
        %v528 = vsel %vm321, %v524, 0
        %v531 = vsel %vm358, %v526, 0
        %533 = vmatpush.bf16.msra.mxu0 0
        %534 = vmatpush.bf16.msra.mxu0 0
        %535 = vmatpush.bf16.msra.mxu0 0
        %536 = vmatpush.bf16.msra.mxu0 0
        %537 = vmatpush.bf16.msra.mxu0 0
        %538 = vmatpush.bf16.msra.mxu0 0
        %539 = vmatpush.bf16.msra.mxu0 0
        %540 = vmatpush.bf16.msra.mxu0 %v531
        %541 = vmatmul.bf16.gmra.mxu0 %v528
        %v542 = vpop.f32.mrf.mxu0
        %v543 = vadd.f32 0.0, %v542
        %v544 = vpop.f32.mrf.mxu0
        %545 = vdwg.mxu0
        %v546 = vpack.c.bf16 %v543, %v543
        %v548 = vunpack.c.l.b16 %v432
        %v549 = vpack.c.b16 %v548, %v548
        %550 = vrot.lane.b32.xlu0 %v549, 8
        %v551 = vpop.permute.xlu0 %550
        %v553 = vunpack.c.l.b16 %v489
        %v554 = vpack.c.b16 %v553, %v553
        %555 = vrot.lane.b32.xlu0 %v554, 16
        %v556 = vpop.permute.xlu0 %555
        %v558 = vunpack.c.l.b16 %v546
        %v559 = vpack.c.b16 %v558, %v558
        %560 = vrot.lane.b32.xlu0 %v559, 24
        %v561 = vpop.permute.xlu0 %560
        %v564 = vsel %vm321, %v375, %v551
        %vm565 = vcmask 130048
        %v567 = vsel %vm565, %v564, %v556
        %vm568 = vcmask 195584
        %v570 = vsel %vm568, %v567, %v561
        %v571 = vld [vmem:[#allocation7] sm:$0xf]
        %v572 = vld [vmem:[#allocation7 + $0x4] sm:$0xf]
        %v573 = vld [vmem:[#allocation7 + $0x8] sm:$0xf]
        %v574 = vld [vmem:[#allocation7 + $0xc] sm:$0xf]
        %v575 = vld [vmem:[%s4] sm:$0x1]
        %v577 = vperm.slane %v575, 0
        %v583 = vunpack.c.l.b16 %v571
        %v584 = vunpack.c.l.b16 %v572
        %v585 = vunpack.c.l.b16 %v573
        %v586 = vunpack.c.l.b16 %v574
        %v587 = vpack.c.b16 %v584, %v583
        %v588 = vpack.c.b16 %v586, %v585
        %v591 = vsel %vm298, %v570, 0
        %593 = vmatpush.bf16.msra.mxu0 0
        %594 = vmatpush.bf16.msra.mxu0 0
        %595 = vmatpush.bf16.msra.mxu0 0
        %596 = vmatpush.bf16.msra.mxu0 0
        %597 = vmatpush.bf16.msra.mxu0 0
        %598 = vmatpush.bf16.msra.mxu0 0
        %599 = vmatpush.bf16.msra.mxu0 %v588
        %600 = vmatpush.bf16.msra.mxu0 %v587
        %601 = vmatmul.bf16.gmra.mxu0 %v591
        %v602 = vpop.f32.mrf.mxu0
        %v603 = vadd.f32 %v577, %v602
        %v604 = vpop.f32.mrf.mxu0
        %605 = vdwg.mxu0
        %v606 = vadd.f32 %v276, %v603
        %607 = vst.msk [vmem:[%s274] sm:$0xff] %vm298, %v606
        %s608 = sand.u32 %s141, 1
        %s609 = scalar_lea.sflag [#allocation4], %s608
        %s610 = sand.u32 %s141, 1
        %s611 = smul.addr %s610, 8
        %s612 = scalar_lea.vmem [#allocation8], %s611
        // Predicated region
        $region53: #{tpu_custom_call.1} parent=39 // pred_check
          %p613 = pneg %p151
        $region54: #{tpu_custom_call.1} parent=39 // pred_check_branch
          %615 = sbr.rel (%p613) target = $region56
        $region55: #{tpu_custom_call.1} parent=39 // pred_region
          %617 = vsyncadd %s609, 0
          %s618 = smul.addr %s23, 8
          %s619 = scalar_lea.hbm %s5, %s618
          %s621 = sshll.u32 %s612, 4
          %s622 = int_to_ptr.vmem [resolvable:$true] %s621
          %s623 = sshll.u32 %s619, 4
          %s624 = int_to_ptr.hbm [resolvable:$true] %s623
          %626 = dma.vmem_to_hbm [thread:$0]  %s622, 128, %s624, %s609
        $region56: #{tpu_custom_call.1} parent=39 // pred_fallthru
          _
      $region40: #{tpu_custom_call.1} parent=5 // pred_fallthru
        _
      %p627 = scmp.le.s32.totalorder 2, %s18
      // Predicated region
      $region57: #{tpu_custom_call.1} parent=5 // pred_check
        %p628 = pneg %p627
      $region58: #{tpu_custom_call.1} parent=5 // pred_check_branch
        %630 = sbr.rel (%p628) target = $region60
      $region59: #{tpu_custom_call.1} parent=5 // pred_region
        %s631 = ssub.s32 %s18, 2
        // Predicated region
        $region61: #{tpu_custom_call.1} parent=59 // pred_check
          %p632 = pneg %p157
        $region62: #{tpu_custom_call.1} parent=59 // pred_check_branch
          %634 = sbr.rel (%p632) target = $region64
        $region63: #{tpu_custom_call.1} parent=59 // pred_region
          %s635 = sand.u32 %s142, 1
          %s636 = scalar_lea.sflag [#allocation4], %s635
          %s637 = sand.u32 %s142, 1
          %s638 = smul.addr %s637, 8
          %s639 = scalar_lea.vmem [#allocation8], %s638
          %641 = dma.done %s636, 128
        $region64: #{tpu_custom_call.1} parent=59 // pred_fallthru
          _
      $region60: #{tpu_custom_call.1} parent=5 // pred_fallthru
        _
    $region6: #{tpu_custom_call.1} parent=1 // loop_footer
      %s22 = sadd.s32 1, %s18
    $region7: #{tpu_custom_call.1} parent=1 // loop_footer_branch
      %17 = sbr.rel target = $region3
    $region8: #{tpu_custom_call.1} parent=1 // loop_exit
      _
    %642 = vsyncpa [#allocation3], 1
    %s643 = scalar_lea.sflag [#allocation3], 1
    %644 = vsyncpa %s643, 1
    %645 = vsyncpa [#allocation6], 1
    %646 = vsyncpa [#allocation4], 1
    %s647 = scalar_lea.sflag [#allocation4], 1
    %648 = vsyncpa %s647, 1

</llo_original>
